<compile_context>
chip_gen: v7x
topology: tpu7x:2x2x1
jax: 0.10.0
libtpu: 0.0.40
codegen_flags: <defaults>
</compile_context>

<pallas_src>
import functools
import math

import jax
import jax.numpy as jnp
from jax.experimental import pallas as pl
from jax.experimental.pallas import tpu as pltpu

HIDDEN = 768
NUM_HEADS = 12
HEAD_DIM = HIDDEN // NUM_HEADS
NUM_LAYERS = 2
INTERMEDIATE = 3072
VOCAB = 128
MAX_POS = 32
TYPE_VOCAB = 2
NUM_CLASSES = 4
CLS_PAD = 128                       # lane-dense padded classifier output width
LN_EPS = 1e-12
ACT_DTYPE = jnp.bfloat16            # weights + activations; accumulation stays f32

# Weights double-buffered ~27 MiB per layer kernel; keep well under v7x's 64 MiB
# physical VMEM while clearing v5e's 16 MiB default scoped limit.
LAYER_VMEM_LIMIT = 48 * 1024 * 1024


def _ln(v_f32, gamma, beta, eps):
    """LayerNorm over the last axis of an f32 value (runs on VPU/XLU)."""
    mean = jnp.mean(v_f32, axis=-1, keepdims=True)
    c = v_f32 - mean
    var = jnp.mean(c * c, axis=-1, keepdims=True)
    return c * jax.lax.rsqrt(var + eps) * gamma.astype(jnp.float32) + beta.astype(jnp.float32)


# --------------------------- fused transformer layer ------------------------

def _bert_layer_kernel(x_ref, mask_ref, wqkv_ref, bqkv_ref, wo_ref, bo_ref,
                       g1_ref, b1n_ref, w1_ref, bi1_ref, w2_ref, bi2_ref,
                       g2_ref, b2n_ref, o_ref, ctx_scr,
                       *, scale, eps, num_heads, head_dim, hidden):
    x = x_ref[0]                                    # (S, H) bf16, this batch element
    seq = x.shape[0]
    del seq  # implied by shapes

    # ---- fused QKV projection: one MXU pass, wqkv resident in VMEM ----
    qkv = jnp.dot(x, wqkv_ref[...], preferred_element_type=jnp.float32)
    qkv = (qkv + bqkv_ref[...].astype(jnp.float32)).astype(x.dtype)   # (S, 3H) bf16

    bias = mask_ref[0]                              # (1, S) f32 additive mask bias

    # ---- multi-head self-attention ----
    # Heads processed in pairs: every slice below starts at a multiple of 128 lanes,
    # and each pair's context goes straight into the VMEM scratch (aligned 128-wide
    # store) -> no list of live per-head partials, no full-width lane concat.
    pair_w = 2 * head_dim                           # 128 lanes
    for pair in range(num_heads // 2):
        lo = pair * pair_w
        q2 = qkv[:, lo:lo + pair_w]
        k2 = qkv[:, hidden + lo:hidden + lo + pair_w]
        v2 = qkv[:, 2 * hidden + lo:2 * hidden + lo + pair_w]
        ctx_halves = []
        for i in range(2):
            sl = slice(i * head_dim, (i + 1) * head_dim)
            s = jax.lax.dot_general(q2[:, sl], k2[:, sl],
                                    (((1,), (1,)), ((), ())),
                                    preferred_element_type=jnp.float32)    # (S, S)
            s = s * scale + bias
            s = s - jnp.max(s, axis=-1, keepdims=True)
            p = jnp.exp(s)
            inv = pl.reciprocal(jnp.sum(p, axis=-1, keepdims=True), approx=True)
            p = (p * inv).astype(x.dtype)
            ctx_halves.append(jnp.dot(p, v2[:, sl],
                                      preferred_element_type=jnp.float32))  # (S, Dh)
        ctx_scr[:, lo:lo + pair_w] = jnp.concatenate(
            ctx_halves, axis=-1).astype(ctx_scr.dtype)

    # ---- attention output projection + residual + LayerNorm1 (fused epilogue) ----
    attn = jnp.dot(ctx_scr[...], wo_ref[...], preferred_element_type=jnp.float32)
    attn = attn + bo_ref[...].astype(jnp.float32) + x.astype(jnp.float32)
    attn = _ln(attn, g1_ref[...], b1n_ref[...], eps)                # (S, H) f32
    attn_b = attn.astype(x.dtype)

    # ---- FFN: w1 + GELU + w2 + residual + LayerNorm2 (intermediate stays in VMEM) ----
    h = jnp.dot(attn_b, w1_ref[...], preferred_element_type=jnp.float32)
    h = h + bi1_ref[...].astype(jnp.float32)
    # TODO(synk): HF BERT uses exact erf-GELU; tanh approximation here (~1e-3 rel diff).
    h = 0.5 * h * (1.0 + jnp.tanh(0.7978845608028654 * (h + 0.044715 * h * h * h)))
    y = jnp.dot(h.astype(x.dtype), w2_ref[...], preferred_element_type=jnp.float32)
    y = y + bi2_ref[...].astype(jnp.float32) + attn
    y = _ln(y, g2_ref[...], b2n_ref[...], eps)
    o_ref[0] = y.astype(o_ref.dtype)


def bert_layer(x, mask_bias, p):
    """One encoder layer, one pallas_call, grid over batch; all weights VMEM-resident."""
    B, S, H = x.shape
    kernel = functools.partial(
        _bert_layer_kernel, scale=1.0 / math.sqrt(HEAD_DIM), eps=LN_EPS,
        num_heads=NUM_HEADS, head_dim=HEAD_DIM, hidden=H)
    return pl.pallas_call(
        kernel,
        out_shape=jax.ShapeDtypeStruct((B, S, H), ACT_DTYPE),
        grid_spec=pltpu.PrefetchScalarGridSpec(
            num_scalar_prefetch=0,
            grid=(B,),
            in_specs=[
                pl.BlockSpec((1, S, H), lambda b: (b, 0, 0)),        # x (residual)
                pl.BlockSpec((1, 1, S), lambda b: (b, 0, 0)),        # additive mask bias
                pl.BlockSpec((H, 3 * H), lambda b: (0, 0)),          # wqkv (fused Q|K|V)
                pl.BlockSpec((1, 3 * H), lambda b: (0, 0)),          # bqkv
                pl.BlockSpec((H, H), lambda b: (0, 0)),              # wo
                pl.BlockSpec((1, H), lambda b: (0, 0)),              # bo
                pl.BlockSpec((1, H), lambda b: (0, 0)),              # ln1 gamma
                pl.BlockSpec((1, H), lambda b: (0, 0)),              # ln1 beta
                pl.BlockSpec((H, INTERMEDIATE), lambda b: (0, 0)),   # w1
                pl.BlockSpec((1, INTERMEDIATE), lambda b: (0, 0)),   # b1
                pl.BlockSpec((INTERMEDIATE, H), lambda b: (0, 0)),   # w2
                pl.BlockSpec((1, H), lambda b: (0, 0)),              # b2
                pl.BlockSpec((1, H), lambda b: (0, 0)),              # ln2 gamma
                pl.BlockSpec((1, H), lambda b: (0, 0)),              # ln2 beta
            ],
            out_specs=pl.BlockSpec((1, S, H), lambda b: (b, 0, 0)),
            scratch_shapes=[pltpu.VMEM((S, H), ACT_DTYPE)],          # attention context
        ),
        compiler_params=pltpu.CompilerParams(
            dimension_semantics=("parallel",),
            vmem_limit_bytes=LAYER_VMEM_LIMIT),
    )(x, mask_bias, p["wqkv"], p["bqkv"], p["wo"], p["bo"], p["ln1_g"], p["ln1_b"],
      p["w1"], p["b1"], p["w2"], p["b2"], p["ln2_g"], p["ln2_b"])


# ----------------------------- embedding LayerNorm --------------------------

def _embed_ln_kernel(x_ref, g_ref, b_ref, o_ref, *, eps):
    v = x_ref[0].astype(jnp.float32)
    o_ref[0] = _ln(v, g_ref[...], b_ref[...], eps).astype(o_ref.dtype)


def embed_layernorm(x, gamma, beta):
    B, S, H = x.shape
    return pl.pallas_call(
        functools.partial(_embed_ln_kernel, eps=LN_EPS),
        out_shape=jax.ShapeDtypeStruct((B, S, H), ACT_DTYPE),
        grid_spec=pltpu.PrefetchScalarGridSpec(
            num_scalar_prefetch=0,
            grid=(B,),
            in_specs=[
                pl.BlockSpec((1, S, H), lambda b: (b, 0, 0)),
                pl.BlockSpec((1, H), lambda b: (0, 0)),
                pl.BlockSpec((1, H), lambda b: (0, 0)),
            ],
            out_specs=pl.BlockSpec((1, S, H), lambda b: (b, 0, 0)),
        ),
        compiler_params=pltpu.CompilerParams(dimension_semantics=("parallel",)),
    )(x, gamma, beta)


# ------------------------------- pooler / head ------------------------------

def _pooler_head_kernel(x_ref, w1_ref, b1_ref, w2_ref, b2_ref, o_ref):
    h = jnp.dot(x_ref[...], w1_ref[...], preferred_element_type=jnp.float32)
    h = jnp.maximum(h + b1_ref[...].astype(jnp.float32), 0.0)       # pre_classifier + ReLU
    # dropout(p=0.5): identity at inference time
    logits = jnp.dot(h.astype(w2_ref.dtype), w2_ref[...],
                     preferred_element_type=jnp.float32)
    o_ref[...] = (logits + b2_ref[...].astype(jnp.float32)).astype(o_ref.dtype)


def pooler_head(cls_rows, pre_w, pre_b, cls_w_pad, cls_b_pad):
    """pre_classifier(768,768)+ReLU fused with classifier; lane-dense padded 128-wide out."""
    B, H = cls_rows.shape
    Np = cls_w_pad.shape[1]
    return pl.pallas_call(
        _pooler_head_kernel,
        out_shape=jax.ShapeDtypeStruct((B, Np), jnp.float32),
        grid_spec=pltpu.PrefetchScalarGridSpec(
            num_scalar_prefetch=0,
            grid=(1,),
            in_specs=[
                pl.BlockSpec((B, H), lambda i: (0, 0)),
                pl.BlockSpec((H, H), lambda i: (0, 0)),
                pl.BlockSpec((1, H), lambda i: (0, 0)),
                pl.BlockSpec((H, Np), lambda i: (0, 0)),
                pl.BlockSpec((1, Np), lambda i: (0, 0)),
            ],
            out_specs=pl.BlockSpec((B, Np), lambda i: (0, 0)),
        ),
    )(cls_rows, pre_w, pre_b, cls_w_pad, cls_b_pad)


# ------------------------------ model (glue) --------------------------------

def bert_classifier_forward(params, input_ids, attention_mask, token_type_ids=None):
    B, S = input_ids.shape
    if token_type_ids is None:
        token_type_ids = jnp.zeros_like(input_ids)

    # TODO(synk): embedding gather has no clean BlockSpec form; done with jnp.take glue.
    emb = (jnp.take(params["word_emb"], input_ids, axis=0)
           + params["pos_emb"][:S][None, :, :]
           + jnp.take(params["type_emb"], token_type_ids, axis=0))            # (B,S,H) f32
    x = embed_layernorm(emb, params["emb_ln_g"], params["emb_ln_b"])          # (B,S,H) bf16

    # additive mask bias ((1-mask)*-1e9) computed once, not per head / grid step
    mask_bias = ((1.0 - attention_mask.astype(jnp.float32))
                 * jnp.float32(-1e9)).reshape(B, 1, S)

    for lp in params["layers"]:
        x = bert_layer(x, mask_bias, lp)                                      # 1 call / layer

    cls = x[:, 0]                                                             # CLS rows (B, H)
    logits_pad = pooler_head(cls, params["pre_w"], params["pre_b"],
                             params["cls_w_pad"], params["cls_b_pad"])
    return logits_pad[:, :NUM_CLASSES]


def init_params(key):
    def nrm(k, shape, scale=0.02):
        return (scale * jax.random.normal(k, shape, dtype=jnp.float32)).astype(ACT_DTYPE)

    keys = jax.random.split(key, 8 + NUM_LAYERS)
    cls_w = 0.02 * jax.random.normal(keys[4], (HIDDEN, NUM_CLASSES), dtype=jnp.float32)
    cls_w_pad = jnp.zeros((HIDDEN, CLS_PAD), jnp.float32).at[:, :NUM_CLASSES].set(cls_w)

    params = {
        "word_emb": 0.02 * jax.random.normal(keys[0], (VOCAB, HIDDEN), jnp.float32),
        "pos_emb": 0.02 * jax.random.normal(keys[1], (MAX_POS, HIDDEN), jnp.float32),
        "type_emb": 0.02 * jax.random.normal(keys[2], (TYPE_VOCAB, HIDDEN), jnp.float32),
        "emb_ln_g": jnp.ones((1, HIDDEN), jnp.float32),
        "emb_ln_b": jnp.zeros((1, HIDDEN), jnp.float32),
        "pre_w": nrm(keys[3], (HIDDEN, HIDDEN)),
        "pre_b": jnp.zeros((1, HIDDEN), jnp.float32),
        "cls_w_pad": cls_w_pad.astype(ACT_DTYPE),        # lane-dense padded classifier
        "cls_b_pad": jnp.zeros((1, CLS_PAD), jnp.float32),
        "layers": [],
    }
    for i in range(NUM_LAYERS):
        lk = jax.random.split(keys[8 + i], 4)
        params["layers"].append({
            "wqkv": nrm(lk[0], (HIDDEN, 3 * HIDDEN)),    # fused [Wq | Wk | Wv]
            "bqkv": jnp.zeros((1, 3 * HIDDEN), jnp.float32),
            "wo": nrm(lk[1], (HIDDEN, HIDDEN)),
            "bo": jnp.zeros((1, HIDDEN), jnp.float32),
            "ln1_g": jnp.ones((1, HIDDEN), jnp.float32),
            "ln1_b": jnp.zeros((1, HIDDEN), jnp.float32),
            "w1": nrm(lk[2], (HIDDEN, INTERMEDIATE)),
            "b1": jnp.zeros((1, INTERMEDIATE), jnp.float32),
            "w2": nrm(lk[3], (INTERMEDIATE, HIDDEN)),
            "b2": jnp.zeros((1, HIDDEN), jnp.float32),
            "ln2_g": jnp.ones((1, HIDDEN), jnp.float32),
            "ln2_b": jnp.zeros((1, HIDDEN), jnp.float32),
        })
    return params


if __name__ == "__main__":
    key = jax.random.PRNGKey(0)
    pk, dk = jax.random.split(key)
    params = init_params(pk)

    B, S = 2, 8
    input_ids = jax.random.randint(dk, (B, S), 0, VOCAB, dtype=jnp.int32)
    attention_mask = jnp.ones((B, S), dtype=jnp.int32)

    logits = bert_classifier_forward(params, input_ids, attention_mask)
    jax.block_until_ready(logits)
    assert logits.shape == (B, NUM_CLASSES)
    print("KERNEL_OK")
</pallas_src>

<mosaic_0001>
module attributes {stable_mosaic.version = 11 : i64} {
  func.func @_embed_ln_kernel(%arg0: i32, %arg1: memref<1x8x768xf32, #tpu.memory_space<vmem>>, %arg2: memref<1x768xf32, #tpu.memory_space<vmem>>, %arg3: memref<1x768xf32, #tpu.memory_space<vmem>>, %arg4: memref<1x8x768xbf16, #tpu.memory_space<vmem>>) attributes {dimension_semantics = [#tpu.dimension_semantics<parallel>], iteration_bounds = array<i64: 2>, scalar_prefetch = 0 : i64, scratch_operands = 0 : i64, tpu.core_type = #tpu.core_type<tc>, window_params = [{transform_indices = @transform_0, window_bounds = array<i64: 1, 8, 768>}, {pipeline_mode = #tpu.pipeline_mode<synchronous>, transform_indices = @transform_1, window_bounds = array<i64: 1, 768>}, {pipeline_mode = #tpu.pipeline_mode<synchronous>, transform_indices = @transform_2, window_bounds = array<i64: 1, 768>}, {transform_indices = @transform_3, window_bounds = array<i64: 1, 8, 768>}]} {
    %c0 = arith.constant 0 : index
    %c0_0 = arith.constant 0 : index
    %c0_1 = arith.constant 0 : index
    %0 = vector.load %arg1[%c0, %c0_0, %c0_1] : memref<1x8x768xf32, #tpu.memory_space<vmem>>, vector<1x8x768xf32>
    %1 = vector.shape_cast %0 : vector<1x8x768xf32> to vector<8x768xf32>
    %c0_2 = arith.constant 0 : index
    %c0_3 = arith.constant 0 : index
    %2 = vector.load %arg2[%c0_2, %c0_3] : memref<1x768xf32, #tpu.memory_space<vmem>>, vector<1x768xf32>
    %c0_4 = arith.constant 0 : index
    %c0_5 = arith.constant 0 : index
    %3 = vector.load %arg3[%c0_4, %c0_5] : memref<1x768xf32, #tpu.memory_space<vmem>>, vector<1x768xf32>
    %cst = arith.constant dense<0.000000e+00> : vector<8xf32>
    %4 = vector.multi_reduction <add>, %1, %cst [1] : vector<8x768xf32> to vector<8xf32>
    %5 = vector.shape_cast %4 : vector<8xf32> to vector<8x1xf32>
    %cst_6 = arith.constant 7.680000e+02 : f32
    %6 = vector.broadcast %cst_6 : f32 to vector<8x1xf32>
    %7 = arith.divf %5, %6 : vector<8x1xf32>
    %8 = vector.broadcast %7 : vector<8x1xf32> to vector<8x768xf32>
    %9 = arith.subf %1, %8 : vector<8x768xf32>
    %10 = arith.mulf %9, %9 : vector<8x768xf32>
    %cst_7 = arith.constant dense<0.000000e+00> : vector<8xf32>
    %11 = vector.multi_reduction <add>, %10, %cst_7 [1] : vector<8x768xf32> to vector<8xf32>
    %12 = vector.shape_cast %11 : vector<8xf32> to vector<8x1xf32>
    %cst_8 = arith.constant 7.680000e+02 : f32
    %13 = vector.broadcast %cst_8 : f32 to vector<8x1xf32>
    %14 = arith.divf %12, %13 : vector<8x1xf32>
    %cst_9 = arith.constant 9.99999996E-13 : f32
    %15 = vector.broadcast %cst_9 : f32 to vector<8x1xf32>
    %16 = arith.addf %14, %15 : vector<8x1xf32>
    %17 = math.rsqrt %16 : vector<8x1xf32>
    %18 = vector.broadcast %17 : vector<8x1xf32> to vector<8x768xf32>
    %19 = arith.mulf %9, %18 : vector<8x768xf32>
    %20 = vector.broadcast %2 : vector<1x768xf32> to vector<8x768xf32>
    %21 = arith.mulf %19, %20 : vector<8x768xf32>
    %22 = vector.broadcast %3 : vector<1x768xf32> to vector<8x768xf32>
    %23 = arith.addf %21, %22 : vector<8x768xf32>
    %24 = arith.truncf %23 : vector<8x768xf32> to vector<8x768xbf16>
    %c0_10 = arith.constant 0 : index
    %c0_11 = arith.constant 0 : index
    %c0_12 = arith.constant 0 : index
    %25 = vector.load %arg4[%c0_10, %c0_11, %c0_12] : memref<1x8x768xbf16, #tpu.memory_space<vmem>>, vector<1x8x768xbf16>
    %26 = vector.shape_cast %25 : vector<1x8x768xbf16> to vector<8x768xbf16>
    %27 = vector.shape_cast %24 : vector<8x768xbf16> to vector<1x8x768xbf16>
    tpu.vector_store %arg4[%c0_10, %c0_11, %c0_12], %27 {strides = array<i32>} : memref<1x8x768xbf16, #tpu.memory_space<vmem>>, vector<1x8x768xbf16>,
    return
  }
  func.func @transform_0(%arg0: i32) -> (i32, i32, i32) {
    %c0_i32 = arith.constant 0 : i32
    %c0_i32_0 = arith.constant 0 : i32
    %c0_i32_1 = arith.constant 0 : i32
    return %arg0, %c0_i32, %c0_i32_0 : i32, i32, i32
  }
  func.func @transform_1(%arg0: i32) -> (i32, i32) {
    %c0_i32 = arith.constant 0 : i32
    %c0_i32_0 = arith.constant 0 : i32
    %c0_i32_1 = arith.constant 0 : i32
    return %c0_i32, %c0_i32_0 : i32, i32
  }
  func.func @transform_2(%arg0: i32) -> (i32, i32) {
    %c0_i32 = arith.constant 0 : i32
    %c0_i32_0 = arith.constant 0 : i32
    %c0_i32_1 = arith.constant 0 : i32
    return %c0_i32, %c0_i32_0 : i32, i32
  }
  func.func @transform_3(%arg0: i32) -> (i32, i32, i32) {
    %c0_i32 = arith.constant 0 : i32
    %c0_i32_0 = arith.constant 0 : i32
    %c0_i32_1 = arith.constant 0 : i32
    return %arg0, %c0_i32, %c0_i32_0 : i32, i32, i32
  }
}

</mosaic_0001>

<llo_original>
// kernel: tpu_custom_call.1
$region0: #{tpu_custom_call.1}
  #allocation0 [shape = 'u32[]', space=smem, size = 0x4, offset = 0x4, fixed_abs, tag = 'smem constant byte address 0x4 - core index']
  #allocation1 [shape = 'u32[144,128]{1,0:T(1,128)}', space=vmem, size = 0x12000, scoped, tag = 'internal scratch']
  %s0 = inlined_call_operand.hbm [shape: f32[2,8,768], index: 0, kind: input, shape index: {}]
  %s1 = inlined_call_operand.hbm [shape: f32[1,768], index: 1, kind: input, shape index: {}]
  %s2 = inlined_call_operand.vmem [shape: f32[1,768], index: 2, kind: input, shape index: {}]
  %s3 = inlined_call_operand.hbm [shape: bf16[2,8,768], index: 3, kind: output, shape index: {}]
  %s4 = sld [smem:[#allocation0]]
  $region53: #{tpu_custom_call.1} parent=0
    _
  %s6 = ssub.s32 1, %s4
  %s7 = scalar_select 0, %s6, %s4
  $region1: #{tpu_custom_call.1} parent=0
    #allocation2 [shape = 'u8[49152]{0}', space=vmem, size = 0xc000, scoped, tag = 'input window, operand 0']
    #allocation3 [shape = 's32[2]{0}', space=sflag, size = 0x8, scoped, tag = 'scoped memory for tpu_custom_call.1']
    #allocation4 [shape = 's32[2]{0}', space=sflag, size = 0x8, scoped, tag = 'scoped memory for tpu_custom_call.1']
    #allocation5 [shape = 'u8[3072]{0}', space=vmem, size = 0xc00, scoped, tag = 'input window, operand 1, single buffered']
    #allocation6 [shape = 's32[1]{0}', space=sflag, size = 0x4, scoped, tag = 'scoped memory for tpu_custom_call.1']
    #allocation7 [shape = 'u8[24576]{0}', space=vmem, size = 0x6000, scoped, tag = 'output window, operand 0']
    %8 = vsyncpa [#allocation3], 0
    %s9 = scalar_lea.sflag [#allocation3], 1
    %10 = vsyncpa %s9, 0
    %11 = vsyncpa [#allocation6], 0
    %12 = vsyncpa [#allocation4], 0
    %s13 = scalar_lea.sflag [#allocation4], 1
    %14 = vsyncpa %s13, 0
    loop: start=0, step=1, limit=4
    $region2: #{tpu_custom_call.1} parent=1 // loop_pre_header
      _
    $region3: #{tpu_custom_call.1} parent=1 // loop_header
      %s16 = sphi 0, %s20
      %p17 = scmp.ge.s32.totalorder %s16, 4
      %s26 = sphi 0, %s28
      %s29 = sphi 0, %s26
      %s30 = sphi 0, %s29
      %s46 = sphi 0, %s30
      %s50 = sphi 0, %s50
      %s52 = sphi 0, %s50
      %s53 = sphi 0, %s52
      %s67 = sphi 0, %s53
      %s71 = sphi 0, %s71
      %s73 = sphi 0, %s71
      %s74 = sphi 0, %s73
      %s88 = sphi 0, %s74
      %s94 = sphi 0, %s96
      %s97 = sphi 0, %s94
      %s98 = sphi 0, %s97
      %s114 = sphi 0, %s98
    $region4: #{tpu_custom_call.1} parent=1 // loop_header_branch
      %19 = sbr.rel (%p17) target = $region8
    $region5: #{tpu_custom_call.1} parent=1 // loop_body
      %s21 = ssub.s32 %s16, 1
      %s22 = ssub.s32 %s16, 2
      %s23 = sadd.s32 %s16, 1
      %s24 = ssub.s32 %s16, %s23
      %p25 = scmp.eq.s32.totalorder %s24, 0
      %s27 = sadd.s32 %s26, 1
      %s28 = scalar_select %p25, %s26, %s27
      %p31 = pneg %p25
      %p32 = scmp.eq.s32.totalorder %s16, 1
      %p33 = por %p31, %p32
      %p34 = scmp.ne.s32.totalorder %s26, %s29
      %p35 = scmp.eq.s32.totalorder %s16, 0
      %p36 = por %p34, %p35
      %p37 = scmp.ne.s32.totalorder %s26, %s29
      %p38 = scmp.eq.s32.totalorder %s21, 1
      %p39 = por %p37, %p38
      %p40 = scmp.ne.s32.totalorder %s29, %s30
      %p41 = scmp.eq.s32.totalorder %s21, 0
      %p42 = por %p40, %p41
      %p43 = scmp.ne.s32.totalorder %s29, %s30
      %p44 = scmp.eq.s32.totalorder %s22, 1
      %p45 = por %p43, %p44
      %p47 = scmp.ne.s32.totalorder %s30, %s46
      %p48 = scmp.eq.s32.totalorder %s22, 0
      %p49 = por %p47, %p48
      %s51 = sadd.s32 %s50, 1
      %p54 = scmp.eq.s32.totalorder %s16, 1
      %p55 = scmp.ne.s32.totalorder %s50, %s52
      %p56 = scmp.eq.s32.totalorder %s16, 0
      %p57 = por %p55, %p56
      %p58 = scmp.ne.s32.totalorder %s50, %s52
      %p59 = scmp.eq.s32.totalorder %s21, 1
      %p60 = por %p58, %p59
      %p61 = scmp.ne.s32.totalorder %s52, %s53
      %p62 = scmp.eq.s32.totalorder %s21, 0
      %p63 = por %p61, %p62
      %p64 = scmp.ne.s32.totalorder %s52, %s53
      %p65 = scmp.eq.s32.totalorder %s22, 1
      %p66 = por %p64, %p65
      %p68 = scmp.ne.s32.totalorder %s53, %s67
      %p69 = scmp.eq.s32.totalorder %s22, 0
      %p70 = por %p68, %p69
      %s72 = sadd.s32 %s71, 1
      %p75 = scmp.eq.s32.totalorder %s16, 1
      %p76 = scmp.ne.s32.totalorder %s71, %s73
      %p77 = scmp.eq.s32.totalorder %s16, 0
      %p78 = por %p76, %p77
      %p79 = scmp.ne.s32.totalorder %s71, %s73
      %p80 = scmp.eq.s32.totalorder %s21, 1
      %p81 = por %p79, %p80
      %p82 = scmp.ne.s32.totalorder %s73, %s74
      %p83 = scmp.eq.s32.totalorder %s21, 0
      %p84 = por %p82, %p83
      %p85 = scmp.ne.s32.totalorder %s73, %s74
      %p86 = scmp.eq.s32.totalorder %s22, 1
      %p87 = por %p85, %p86
      %p89 = scmp.ne.s32.totalorder %s74, %s88
      %p90 = scmp.eq.s32.totalorder %s22, 0
      %p91 = por %p89, %p90
      %s92 = ssub.s32 %s16, %s23
      %p93 = scmp.eq.s32.totalorder %s92, 0
      %s95 = sadd.s32 %s94, 1
      %s96 = scalar_select %p93, %s94, %s95
      %p99 = pneg %p93
      %p100 = scmp.eq.s32.totalorder %s16, 1
      %p101 = por %p99, %p100
      %p102 = scmp.ne.s32.totalorder %s94, %s97
      %p103 = scmp.eq.s32.totalorder %s16, 0
      %p104 = por %p102, %p103
      %p105 = scmp.ne.s32.totalorder %s94, %s97
      %p106 = scmp.eq.s32.totalorder %s21, 1
      %p107 = por %p105, %p106
      %p108 = scmp.ne.s32.totalorder %s97, %s98
      %p109 = scmp.eq.s32.totalorder %s21, 0
      %p110 = por %p108, %p109
      %p111 = scmp.ne.s32.totalorder %s97, %s98
      %p112 = scmp.eq.s32.totalorder %s22, 1
      %p113 = por %p111, %p112
      %p115 = scmp.ne.s32.totalorder %s98, %s114
      %p116 = scmp.eq.s32.totalorder %s22, 0
      %p117 = por %p115, %p116
      %p118 = scmp.le.s32.totalorder 1, %s16
      %p119 = scmp.lt.s32.totalorder %s16, 3
      %p120 = pnand %p118, %p119
      %p121 = pneg %p120
      // Predicated region
      $region9: #{tpu_custom_call.1} parent=5 // pred_check
        _
      $region10: #{tpu_custom_call.1} parent=5 // pred_check_branch
        %123 = sbr.rel (%p120) target = $region12
      $region11: #{tpu_custom_call.1} parent=5 // pred_region
        %s124 = ssub.s32 %s16, 1
        // Predicated region
        $region13: #{tpu_custom_call.1} parent=11 // pred_check
          %p125 = pneg %p63
        $region14: #{tpu_custom_call.1} parent=11 // pred_check_branch
          %127 = sbr.rel (%p125) target = $region16
        $region15: #{tpu_custom_call.1} parent=11 // pred_region
          %s129 = ssub.s32 96, 96
          %130 = vsyncadd [#allocation6], %s129
          %s132 = sshll.u32 [#allocation5], 4
          %s133 = int_to_ptr.vmem [resolvable:$true] %s132
          %135 = dma.hbm_to_vmem [thread:$0]  %s1, 96, %s133, [#allocation6]
        $region16: #{tpu_custom_call.1} parent=11 // pred_fallthru
          _
        // Predicated region
        $region17: #{tpu_custom_call.1} parent=11 // pred_check
          %p136 = pneg %p84
        $region18: #{tpu_custom_call.1} parent=11 // pred_check_branch
          %138 = sbr.rel (%p136) target = $region20
        $region19: #{tpu_custom_call.1} parent=11 // pred_region
          _
        $region20: #{tpu_custom_call.1} parent=11 // pred_fallthru
          _
      $region12: #{tpu_custom_call.1} parent=5 // pred_fallthru
        _
      %p139 = scmp.lt.s32.totalorder %s16, 2
      // Predicated region
      $region21: #{tpu_custom_call.1} parent=5 // pred_check
        %p140 = pneg %p139
      $region22: #{tpu_custom_call.1} parent=5 // pred_check_branch
        %142 = sbr.rel (%p140) target = $region24
      $region23: #{tpu_custom_call.1} parent=5 // pred_region
        // Predicated region
        $region25: #{tpu_custom_call.1} parent=23 // pred_check
          %p143 = pneg %p36
        $region26: #{tpu_custom_call.1} parent=23 // pred_check_branch
          %145 = sbr.rel (%p143) target = $region28
        $region27: #{tpu_custom_call.1} parent=23 // pred_region
          %s146 = sand.u32 %s26, 1
          %s147 = scalar_lea.sflag [#allocation3], %s146
          %s148 = sand.u32 %s26, 1
          %s149 = smul.addr %s148, 48
          %s150 = scalar_lea.vmem [#allocation2], %s149
          %s152 = ssub.s32 768, 768
          %153 = vsyncadd %s147, %s152
          %s154 = smul.addr %s16, 6
          %s155 = smul.addr %s154, 128
          %s156 = scalar_lea.hbm %s0, %s155
          %s158 = sshll.u32 %s150, 4
          %s159 = int_to_ptr.vmem [resolvable:$true] %s158
          %161 = dma.hbm_to_vmem [thread:$0]  %s156, 768, %s159, %s147
        $region28: #{tpu_custom_call.1} parent=23 // pred_fallthru
          _
      $region24: #{tpu_custom_call.1} parent=5 // pred_fallthru
        _
      %p162 = scmp.le.s32.totalorder 1, %s16
      %p163 = scmp.lt.s32.totalorder %s16, 3
      %p164 = pnand %p162, %p163
      %p165 = pneg %p164
      // Predicated region
      $region29: #{tpu_custom_call.1} parent=5 // pred_check
        _
      $region30: #{tpu_custom_call.1} parent=5 // pred_check_branch
        %167 = sbr.rel (%p164) target = $region32
      $region31: #{tpu_custom_call.1} parent=5 // pred_region
        %s168 = ssub.s32 %s16, 1
        %s169 = sand.u32 %s29, 1
        %s170 = scalar_lea.sflag [#allocation3], %s169
        %s171 = sand.u32 %s29, 1
        %s172 = smul.addr %s171, 48
        %s173 = scalar_lea.vmem [#allocation2], %s172
        // Predicated region
        $region33: #{tpu_custom_call.1} parent=31 // pred_check
          %p174 = pneg %p42
        $region34: #{tpu_custom_call.1} parent=31 // pred_check_branch
          %176 = sbr.rel (%p174) target = $region36
        $region35: #{tpu_custom_call.1} parent=31 // pred_region
          %177 = dma.done %s170, 768
        $region36: #{tpu_custom_call.1} parent=31 // pred_fallthru
          _
        // Predicated region
        $region37: #{tpu_custom_call.1} parent=31 // pred_check
          %p178 = pneg %p63
        $region38: #{tpu_custom_call.1} parent=31 // pred_check_branch
          %180 = sbr.rel (%p178) target = $region40
        $region39: #{tpu_custom_call.1} parent=31 // pred_region
          %181 = dma.done [#allocation6], 96
        $region40: #{tpu_custom_call.1} parent=31 // pred_fallthru
          _
        %s182 = sand.u32 %s29, 1
        %s183 = scalar_lea.sflag [#allocation3], %s182
        %s184 = sand.u32 %s29, 1
        %s185 = smul.addr %s184, 48
        %s186 = scalar_lea.vmem [#allocation2], %s185
        %p187 = pneg %p42
        %p188 = pneg %p39
        %p189 = pneg %p63
        %p190 = pneg %p60
        %p191 = pneg %p84
        %p192 = pneg %p81
        %p193 = pneg %p110
        %p194 = pneg %p107
        %s195 = sand.u32 %s97, 1
        %s196 = scalar_lea.sflag [#allocation4], %s195
        %s197 = sand.u32 %s97, 1
        %s198 = smul.addr %s197, 24
        %s199 = scalar_lea.vmem [#allocation7], %s198
        %v200 = vld [vmem:[%s173] sm:$0xff]
        %v201 = vld [vmem:[%s173 + $0x8] sm:$0xff]
        %v202 = vld [vmem:[%s173 + $0x10] sm:$0xff]
        %v203 = vld [vmem:[%s173 + $0x18] sm:$0xff]
        %v204 = vld [vmem:[%s173 + $0x20] sm:$0xff]
        %v205 = vld [vmem:[%s173 + $0x28] sm:$0xff]
        %v206 = vld [vmem:[#allocation5] sm:$0x3f]
        %v207 = vld [vmem:[%s2] sm:$0x3f]
        %v208 = vadd.f32 %v200, %v201
        %v209 = vadd.f32 %v208, %v202
        %v210 = vadd.f32 %v209, %v203
        %v211 = vadd.f32 %v210, %v204
        %v212 = vadd.f32 %v211, %v205
        %213 = vadd.xlane.f32.xlu0 %v212
        %v214 = vpop.xlane.xlu0 %213
        %v215 = vrcp.pop 768.0
        %v216 = vmul.f32 %v214, %v215
        %v217 = vsub.f32 %v200, %v216
        %v218 = vsub.f32 %v201, %v216
        %v219 = vsub.f32 %v202, %v216
        %v220 = vsub.f32 %v203, %v216
        %v221 = vsub.f32 %v204, %v216
        %v222 = vsub.f32 %v205, %v216
        %v223 = vmul.f32 %v217, %v217
        %v224 = vmul.f32 %v218, %v218
        %v225 = vmul.f32 %v219, %v219
        %v226 = vmul.f32 %v220, %v220
        %v227 = vmul.f32 %v221, %v221
        %v228 = vmul.f32 %v222, %v222
        %v229 = vadd.f32 %v223, %v224
        %v230 = vadd.f32 %v229, %v225
        %v231 = vadd.f32 %v230, %v226
        %v232 = vadd.f32 %v231, %v227
        %v233 = vadd.f32 %v232, %v228
        %234 = vadd.xlane.f32.xlu0 %v233
        %v235 = vpop.xlane.xlu0 %234
        %v236 = vmul.f32 %v235, %v215
        %v237 = vadd.f32 %v236, 1e-12
        %v238 = vrsqrt.pop %v237
        %v239 = vmul.f32 %v217, %v238
        %v240 = vmul.f32 %v218, %v238
        %v241 = vmul.f32 %v219, %v238
        %v242 = vmul.f32 %v220, %v238
        %v243 = vmul.f32 %v221, %v238
        %v244 = vmul.f32 %v222, %v238
        %v246 = vlaneseq
        %v247 = vshrl.u32 %v246, 7
        %v248 = vsub.s32 0, %v247
        %v249 = vrot.slane %v206, %v248
        %v250 = vlaneseq
        %v251 = vshrl.u32 %v250, 7
        %v252 = vsub.s32 1, %v251
        %v253 = vrot.slane %v206, %v252
        %v254 = vlaneseq
        %v255 = vshrl.u32 %v254, 7
        %v256 = vsub.s32 2, %v255
        %v257 = vrot.slane %v206, %v256
        %v258 = vlaneseq
        %v259 = vshrl.u32 %v258, 7
        %v260 = vsub.s32 3, %v259
        %v261 = vrot.slane %v206, %v260
        %v262 = vlaneseq
        %v263 = vshrl.u32 %v262, 7
        %v264 = vsub.s32 4, %v263
        %v265 = vrot.slane %v206, %v264
        %v266 = vlaneseq
        %v267 = vshrl.u32 %v266, 7
        %v268 = vsub.s32 5, %v267
        %v269 = vrot.slane %v206, %v268
        %v276 = vmul.f32 %v239, %v249
        %v277 = vmul.f32 %v240, %v253
        %v278 = vmul.f32 %v241, %v257
        %v279 = vmul.f32 %v242, %v261
        %v280 = vmul.f32 %v243, %v265
        %v281 = vmul.f32 %v244, %v269
        %v283 = vlaneseq
        %v284 = vshrl.u32 %v283, 7
        %v285 = vsub.s32 0, %v284
        %v286 = vrot.slane %v207, %v285
        %v287 = vlaneseq
        %v288 = vshrl.u32 %v287, 7
        %v289 = vsub.s32 1, %v288
        %v290 = vrot.slane %v207, %v289
        %v291 = vlaneseq
        %v292 = vshrl.u32 %v291, 7
        %v293 = vsub.s32 2, %v292
        %v294 = vrot.slane %v207, %v293
        %v295 = vlaneseq
        %v296 = vshrl.u32 %v295, 7
        %v297 = vsub.s32 3, %v296
        %v298 = vrot.slane %v207, %v297
        %v299 = vlaneseq
        %v300 = vshrl.u32 %v299, 7
        %v301 = vsub.s32 4, %v300
        %v302 = vrot.slane %v207, %v301
        %v303 = vlaneseq
        %v304 = vshrl.u32 %v303, 7
        %v305 = vsub.s32 5, %v304
        %v306 = vrot.slane %v207, %v305
        %v313 = vadd.f32 %v276, %v286
        %v314 = vadd.f32 %v277, %v290
        %v315 = vadd.f32 %v278, %v294
        %v316 = vadd.f32 %v279, %v298
        %v317 = vadd.f32 %v280, %v302
        %v318 = vadd.f32 %v281, %v306
        %v319 = vpack.c.bf16 %v313, %v313
        %v320 = vpack.c.bf16 %v314, %v314
        %v321 = vpack.c.bf16 %v315, %v315
        %v322 = vpack.c.bf16 %v316, %v316
        %v323 = vpack.c.bf16 %v317, %v317
        %v324 = vpack.c.bf16 %v318, %v318
        %v331 = vunpack.c.l.b16 %v319
        %v332 = vunpack.c.l.b16 %v320
        %v333 = vunpack.c.l.b16 %v321
        %v334 = vunpack.c.l.b16 %v322
        %v335 = vunpack.c.l.b16 %v323
        %v336 = vunpack.c.l.b16 %v324
        %v337 = vpack.c.b16 %v332, %v331
        %v338 = vpack.c.b16 %v334, %v333
        %v339 = vpack.c.b16 %v336, %v335
        %343 = vst [vmem:[%s199] sm:$0xff] %v337
        %344 = vst [vmem:[%s199 + $0x8] sm:$0xff] %v338
        %345 = vst [vmem:[%s199 + $0x10] sm:$0xff] %v339
        %s346 = sand.u32 %s97, 1
        %s347 = scalar_lea.sflag [#allocation4], %s346
        %s348 = sand.u32 %s97, 1
        %s349 = smul.addr %s348, 24
        %s350 = scalar_lea.vmem [#allocation7], %s349
        // Predicated region
        $region41: #{tpu_custom_call.1} parent=31 // pred_check
          %p351 = pneg %p107
        $region42: #{tpu_custom_call.1} parent=31 // pred_check_branch
          %353 = sbr.rel (%p351) target = $region44
        $region43: #{tpu_custom_call.1} parent=31 // pred_region
          %s355 = ssub.s32 384, 384
          %356 = vsyncadd %s347, %s355
          %s357 = smul.addr %s21, 6
          %s358 = smul.addr %s357, 64
          %s359 = scalar_lea.hbm %s3, %s358
          %s361 = sshll.u32 %s350, 4
          %s362 = int_to_ptr.vmem [resolvable:$true] %s361
          %364 = dma.vmem_to_hbm [thread:$0]  %s362, 384, %s359, %s347
        $region44: #{tpu_custom_call.1} parent=31 // pred_fallthru
          _
      $region32: #{tpu_custom_call.1} parent=5 // pred_fallthru
        _
      %p365 = scmp.le.s32.totalorder 2, %s16
      // Predicated region
      $region45: #{tpu_custom_call.1} parent=5 // pred_check
        %p366 = pneg %p365
      $region46: #{tpu_custom_call.1} parent=5 // pred_check_branch
        %368 = sbr.rel (%p366) target = $region48
      $region47: #{tpu_custom_call.1} parent=5 // pred_region
        %s369 = ssub.s32 %s16, 2
        // Predicated region
        $region49: #{tpu_custom_call.1} parent=47 // pred_check
          %p370 = pneg %p113
        $region50: #{tpu_custom_call.1} parent=47 // pred_check_branch
          %372 = sbr.rel (%p370) target = $region52
        $region51: #{tpu_custom_call.1} parent=47 // pred_region
          %s373 = sand.u32 %s98, 1
          %s374 = scalar_lea.sflag [#allocation4], %s373
          %s375 = sand.u32 %s98, 1
          %s376 = smul.addr %s375, 24
          %s377 = scalar_lea.vmem [#allocation7], %s376
          %378 = dma.done %s374, 384
        $region52: #{tpu_custom_call.1} parent=47 // pred_fallthru
          _
      $region48: #{tpu_custom_call.1} parent=5 // pred_fallthru
        _
    $region6: #{tpu_custom_call.1} parent=1 // loop_footer
      %s20 = sadd.s32 1, %s16
    $region7: #{tpu_custom_call.1} parent=1 // loop_footer_branch
      %15 = sbr.rel target = $region3
    $region8: #{tpu_custom_call.1} parent=1 // loop_exit
      _
    %379 = vsyncpa [#allocation3], 1
    %s380 = scalar_lea.sflag [#allocation3], 1
    %381 = vsyncpa %s380, 1
    %382 = vsyncpa [#allocation6], 1
    %383 = vsyncpa [#allocation4], 1
    %s384 = scalar_lea.sflag [#allocation4], 1
    %385 = vsyncpa %s384, 1

</llo_original>
